<compile_context>
chip_gen: v7x
topology: tpu7x:2x2x1
jax: 0.10.0
libtpu: 0.0.40
codegen_flags: <defaults>
</compile_context>

<pallas_src>
import jax
import jax.numpy as jnp
from jax.experimental import pallas as pl
from jax.experimental.pallas import tpu as pltpu


def _elu_plus_one_kernel(x_ref, o_ref):
    """Elementwise elu(x) + 1 on one (block_rows, lane) tile in VMEM."""
    x = x_ref[...].astype(jnp.float32)
    # elu(x) + 1 == x + 1      for x > 0
    #              exp(x)      otherwise
    # exp on the negative branch avoids the 1 + expm1(x) cancellation.
    o_ref[...] = jnp.where(x > 0, x + 1.0, jnp.exp(x)).astype(o_ref.dtype)


def _elu_plus_one_pallas(x_flat, *, buffer_bytes=4 << 20):
    """Run the elementwise feature map on a flattened 1-D array."""
    n = x_flat.shape[0]
    if n == 0:
        return x_flat
    dtype = x_flat.dtype
    itemsize = jnp.dtype(dtype).itemsize

    # Lane-dense slab: widest lane (multiple of 128, up to 512) dividing n so
    # the common path needs no padding copy at all.
    lane = None
    for cand in (512, 256, 128):
        if n % cand == 0:
            lane = cand
            break
    pad = 0
    if lane is None:
        lane = 128
        pad = (-n) % lane          # < 128 padded elements (rare path)
        x_flat = jnp.pad(x_flat, (0, pad))
    rows = (n + pad) // lane
    x2d = x_flat.reshape(rows, lane)

    # Sublane granularity: 8 for 32-bit, 16 for bf16, 32 for 8-bit dtypes.
    sub = 8 * max(1, 4 // itemsize)
    # Rows per tile from a ~4 MiB per-buffer VMEM budget (dtype-aware).
    budget_rows = max(sub, (buffer_bytes // (lane * itemsize)) // sub * sub)

    if rows < sub:
        # Tiny input: one block equal to the full array (exempt from the
        # (8, 128) divisibility rule).
        block_rows = rows
    else:
        block_rows = min(budget_rows, (rows // sub) * sub)
        if rows >= 2 * sub:
            # Keep >= 2 grid steps so the "parallel" axis can shard across
            # both v7x TensorCores instead of leaving one idle.
            half = max(sub, (pl.cdiv(rows, 2) // sub) * sub)
            block_rows = min(block_rows, half)

    grid = (pl.cdiv(rows, block_rows),)   # partial tail block write is masked

    y2d = pl.pallas_call(
        _elu_plus_one_kernel,
        out_shape=jax.ShapeDtypeStruct((rows, lane), dtype),
        grid_spec=pltpu.PrefetchScalarGridSpec(
            num_scalar_prefetch=0,
            grid=grid,
            in_specs=[pl.BlockSpec((block_rows, lane), lambda i: (i, 0))],
            out_specs=pl.BlockSpec((block_rows, lane), lambda i: (i, 0)),
        ),
        compiler_params=pltpu.CompilerParams(
            dimension_semantics=("parallel",),
            vmem_limit_bytes=32 * 1024 * 1024,
        ),
        cost_estimate=pl.CostEstimate(
            flops=2 * rows * lane,
            transcendentals=rows * lane,
            bytes_accessed=2 * rows * lane * itemsize,
        ),
    )(x2d)

    y_flat = y2d.reshape(-1)
    if pad:
        y_flat = y_flat[:n]
    return y_flat


class FeatureMap:
    """JAX/Pallas port of the FeatureMap interface."""

    def __init__(self, query_dims):
        self.query_dims = query_dims

    def new_feature_map(self, device=None):
        """No random parameters for the (deterministic) elu+1 feature map."""
        # TODO(synk): random feature maps (e.g. Favor) would resample params here.
        return None

    def forward_queries(self, x):
        """Encode the queries `x` using this feature map."""
        return self(x)

    def forward_keys(self, x):
        """Encode the keys `x` using this feature map."""
        return self(x)

    def forward(self, x):
        """Encode x (..., D) with elu(x) + 1, computed in a Pallas kernel."""
        assert x.shape[-1] == self.query_dims
        orig_shape = x.shape
        y_flat = _elu_plus_one_pallas(x.reshape(-1))
        return y_flat.reshape(orig_shape)

    def __call__(self, x):
        return self.forward(x)

    @classmethod
    def factory(cls, *args, **kwargs):
        """Return a function that, given query_dims, builds this feature map."""

        def inner(query_dims):
            return cls(query_dims, *args, **kwargs)

        return inner


def _reference(x):
    """Pure-JAX reference: elu(x) + 1."""
    xf = x.astype(jnp.float32)
    return jnp.where(xf > 0, xf + 1.0, jnp.exp(xf))


if __name__ == "__main__":
    key = jax.random.PRNGKey(0)
    B, L, H, D = 2, 8, 4, 32  # batch, seq, heads, query_dims
    x = jax.random.normal(key, (B, L, H, D), dtype=jnp.float32)

    fm_factory = FeatureMap.factory()
    fm = fm_factory(D)
    fm.new_feature_map(None)

    q_feat = fm.forward_queries(x)
    k_feat = fm.forward_keys(x)
    jax.block_until_ready((q_feat, k_feat))

    ref = _reference(x)
    assert q_feat.shape == x.shape and q_feat.dtype == x.dtype
    assert jnp.allclose(q_feat, ref, atol=1e-5, rtol=1e-5)
    assert jnp.allclose(k_feat, ref, atol=1e-5, rtol=1e-5)

    # Ragged, non-128-divisible size (exercises the small-pad path and the
    # partial tail block), plus a bf16 input.
    x_ragged = jax.random.normal(key, (3, 7, 5, D), dtype=jnp.float32)
    y_ragged = fm(x_ragged)
    jax.block_until_ready(y_ragged)
    assert jnp.allclose(y_ragged, _reference(x_ragged), atol=1e-5, rtol=1e-5)

    x_bf16 = x.astype(jnp.bfloat16)
    y_bf16 = fm(x_bf16)
    jax.block_until_ready(y_bf16)
    assert y_bf16.dtype == jnp.bfloat16
    assert jnp.allclose(y_bf16.astype(jnp.float32),
                        _reference(x_bf16),
                        atol=1e-2, rtol=1e-2)

    print("KERNEL_OK")
</pallas_src>

<mosaic_0001>
module attributes {stable_mosaic.version = 11 : i64} {
  func.func @_elu_plus_one_kernel(%arg0: i32, %arg1: memref<4x512xf32, #tpu.memory_space<vmem>>, %arg2: memref<4x512xf32, #tpu.memory_space<vmem>>) attributes {dimension_semantics = [#tpu.dimension_semantics<parallel>], iteration_bounds = array<i64: 1>, scalar_prefetch = 0 : i64, scratch_operands = 0 : i64, tpu.core_type = #tpu.core_type<tc>, window_params = [{transform_indices = @transform_0, window_bounds = array<i64: 4, 512>}, {transform_indices = @transform_1, window_bounds = array<i64: 4, 512>}]} {
    %c0 = arith.constant 0 : index
    %c0_0 = arith.constant 0 : index
    %0 = vector.load %arg1[%c0, %c0_0] : memref<4x512xf32, #tpu.memory_space<vmem>>, vector<4x512xf32>
    %cst = arith.constant 0.000000e+00 : f32
    %1 = vector.broadcast %cst : f32 to vector<4x512xf32>
    %2 = arith.cmpf ogt, %0, %1 : vector<4x512xf32>
    %cst_1 = arith.constant 1.000000e+00 : f32
    %3 = vector.broadcast %cst_1 : f32 to vector<4x512xf32>
    %4 = arith.addf %0, %3 : vector<4x512xf32>
    %5 = math.exp %0 : vector<4x512xf32>
    %6 = arith.select %2, %4, %5 : vector<4x512xi1>, vector<4x512xf32>
    %c0_2 = arith.constant 0 : index
    %c0_3 = arith.constant 0 : index
    %7 = vector.load %arg2[%c0_2, %c0_3] : memref<4x512xf32, #tpu.memory_space<vmem>>, vector<4x512xf32>
    tpu.vector_store %arg2[%c0_2, %c0_3], %6 {strides = array<i32>} : memref<4x512xf32, #tpu.memory_space<vmem>>, vector<4x512xf32>,
    return
  }
  func.func @transform_0(%arg0: i32) -> (i32, i32) {
    %c0_i32 = arith.constant 0 : i32
    %c0_i32_0 = arith.constant 0 : i32
    return %arg0, %c0_i32 : i32, i32
  }
  func.func @transform_1(%arg0: i32) -> (i32, i32) {
    %c0_i32 = arith.constant 0 : i32
    %c0_i32_0 = arith.constant 0 : i32
    return %arg0, %c0_i32 : i32, i32
  }
}

</mosaic_0001>

<llo_original>
// kernel: tpu_custom_call.1
$region0: #{tpu_custom_call.1}
  #allocation0 [shape = 'u32[]', space=smem, size = 0x4, offset = 0x4, fixed_abs, tag = 'smem constant byte address 0x4 - core index']
  #allocation1 [shape = 'u32[144,128]{1,0:T(1,128)}', space=vmem, size = 0x12000, scoped, tag = 'internal scratch']
  %s0 = inlined_call_operand.hbm [shape: f32[4,512], index: 0, kind: input, shape index: {}]
  %s1 = inlined_call_operand.hbm [shape: f32[4,512], index: 1, kind: output, shape index: {}]
  %s2 = sld [smem:[#allocation0]]
  $region18: #{tpu_custom_call.1} parent=0
    _
  %s4 = ssub.s32 1, %s2
  %s5 = scalar_select 0, %s4, %s2
  $region1: #{tpu_custom_call.1} parent=0
    #allocation2 [shape = 'u8[8192]{0}', space=vmem, size = 0x2000, scoped, tag = 'input window, operand 0, single buffered']
    #allocation3 [shape = 's32[1]{0}', space=sflag, size = 0x4, scoped, tag = 'scoped memory for tpu_custom_call.1']
    #allocation4 [shape = 's32[1]{0}', space=sflag, size = 0x4, scoped, tag = 'scoped memory for tpu_custom_call.1']
    #allocation5 [shape = 'u8[8192]{0}', space=vmem, size = 0x2000, scoped, tag = 'output window, operand 0, single buffered']
    %6 = vsyncpa [#allocation3], 0
    %7 = vsyncpa [#allocation4], 0
    // Predicated region
    $region2: #{tpu_custom_call.1} parent=1 // pred_check
      _
    $region3: #{tpu_custom_call.1} parent=1 // pred_check_branch
      %9 = sbr.rel (0) target = $region5
    $region4: #{tpu_custom_call.1} parent=1 // pred_region
      %s11 = ssub.s32 256, 256
      %12 = vsyncadd [#allocation3], %s11
      %s14 = sshll.u32 [#allocation2], 4
      %s15 = int_to_ptr.vmem [resolvable:$true] %s14
      %17 = dma.hbm_to_vmem [thread:$0]  %s0, 256, %s15, [#allocation3]
    $region5: #{tpu_custom_call.1} parent=1 // pred_fallthru
      _
    // Predicated region
    $region6: #{tpu_custom_call.1} parent=1 // pred_check
      _
    $region7: #{tpu_custom_call.1} parent=1 // pred_check_branch
      %19 = sbr.rel (0) target = $region9
    $region8: #{tpu_custom_call.1} parent=1 // pred_region
      %20 = dma.done [#allocation3], 256
    $region9: #{tpu_custom_call.1} parent=1 // pred_fallthru
      _
    %v21 = vld [vmem:[#allocation2] sm:$0xff]
    %v22 = vld [vmem:[#allocation2 + $0x8] sm:$0xff]
    %vm23 = vcmp.gt.f32.partialorder %v21, 0.0
    %vm24 = vcmp.gt.f32.partialorder %v22, 0.0
    %v25 = vadd.f32 %v21, 1.0
    %v26 = vadd.f32 %v22, 1.0
    %v27 = vmul.f32 %v21, 1.442695
    %v28 = vpow.pop %v27
    %v29 = vmul.f32 %v22, 1.442695
    %v30 = vpow.pop %v29
    %v31 = vsel %vm23, %v25, %v28
    %v32 = vsel %vm24, %v26, %v30
    %33 = vst [vmem:[#allocation5] sm:$0xff] %v31
    %34 = vst [vmem:[#allocation5 + $0x8] sm:$0xff] %v32
    // Predicated region
    $region10: #{tpu_custom_call.1} parent=1 // pred_check
      _
    $region11: #{tpu_custom_call.1} parent=1 // pred_check_branch
      %36 = sbr.rel (0) target = $region13
    $region12: #{tpu_custom_call.1} parent=1 // pred_region
      %s38 = ssub.s32 256, 256
      %39 = vsyncadd [#allocation4], %s38
      %s41 = sshll.u32 [#allocation5], 4
      %s42 = int_to_ptr.vmem [resolvable:$true] %s41
      %44 = dma.vmem_to_hbm [thread:$0]  %s42, 256, %s1, [#allocation4]
    $region13: #{tpu_custom_call.1} parent=1 // pred_fallthru
      _
    // Predicated region
    $region14: #{tpu_custom_call.1} parent=1 // pred_check
      _
    $region15: #{tpu_custom_call.1} parent=1 // pred_check_branch
      %46 = sbr.rel (0) target = $region17
    $region16: #{tpu_custom_call.1} parent=1 // pred_region
      %47 = dma.done [#allocation4], 256
    $region17: #{tpu_custom_call.1} parent=1 // pred_fallthru
      _
    %48 = vsyncpa [#allocation3], 1
    %49 = vsyncpa [#allocation4], 1

</llo_original>
